<compile_context>
chip_gen: v7x
topology: tpu7x:2x2x1
jax: 0.10.0
libtpu: 0.0.40
codegen_flags: <defaults>
</compile_context>

<pallas_src>
import math

import jax
import jax.numpy as jnp
from jax.experimental import pallas as pl
from jax.experimental.pallas import tpu as pltpu


_NEG_BIG = -1e30  # bias for padded classes; exp(_NEG_BIG - m) underflows to 0


def _round_up(x, m):
    return ((x + m - 1) // m) * m


# ---------------------------------------------------------------------------
# Kernels
# ---------------------------------------------------------------------------

def _logits_kernel(feat_ref, wt_ref, b_ref, out_ref):
    """Inference path: logits = feats @ W_t + b (no CE tail, lane-dense out)."""
    logits = jnp.dot(feat_ref[...], wt_ref[...],
                     preferred_element_type=jnp.float32)            # (TB, Lp) f32
    logits = logits + b_ref[...].astype(jnp.float32)
    out_ref[...] = logits.astype(out_ref.dtype)


def _make_loss_kernel(batch, tile_b):
    """Training path: accumulate sum of per-row CE losses into a (1,1) output."""

    def kernel(feat_ref, wt_ref, b_ref, labels_ref, loss_ref):
        i = pl.program_id(0)

        @pl.when(i == 0)
        def _():
            loss_ref[...] = jnp.zeros_like(loss_ref)

        logits = jnp.dot(feat_ref[...], wt_ref[...],
                         preferred_element_type=jnp.float32)        # (TB, Lp) f32
        logits = logits + b_ref[...].astype(jnp.float32)

        # Cross-entropy in f32: loss_i = logsumexp(logits_i) - logits_i[y_i]
        m = jnp.max(logits, axis=-1, keepdims=True)                  # (TB, 1)
        lse = m + jnp.log(jnp.sum(jnp.exp(logits - m), axis=-1, keepdims=True))

        tb, lp = logits.shape
        classes = jax.lax.broadcasted_iota(jnp.int32, (tb, lp), 1)   # (TB, Lp)
        labels = labels_ref[...]                                     # (TB, 1) int32
        picked = jnp.sum(jnp.where(classes == labels, logits, 0.0),
                         axis=-1, keepdims=True)
        per_row = lse - picked                                       # (TB, 1)

        # Mask ragged-tile rows (global row >= batch) and ignored labels (<0).
        # jnp.where (not multiply) so garbage rows can never inject inf/NaN.
        rows = jax.lax.broadcasted_iota(jnp.int32, (tb, 1), 0) + i * tile_b
        valid = (rows < batch) & (labels >= 0)
        partial_sum = jnp.sum(jnp.where(valid, per_row, 0.0))

        loss_ref[...] = loss_ref[...] + partial_sum

    return kernel


# ---------------------------------------------------------------------------
# Wrapper helpers
# ---------------------------------------------------------------------------

def prepare_classifier_params(weight, bias, param_dtype=None):
    """Pre-transpose + lane-pad the classifier params.  Cache across steps.

    weight: (L, D) torch.nn.Linear layout -> returns wt (D, Lp), b_pad (1, Lp), L.
    """
    L, D = weight.shape
    Lp = max(_round_up(L, 128), 128)
    w = weight if param_dtype is None else weight.astype(param_dtype)
    wt = jnp.zeros((D, Lp), dtype=w.dtype).at[:, :L].set(w.T)
    # Padded classes get a huge negative bias so they never win max/logsumexp.
    b = jnp.full((1, Lp), _NEG_BIG, dtype=jnp.float32)
    b = b.at[0, :L].set(bias.astype(jnp.float32))
    return wt, b, L


def _choose_tile(batch, block_b):
    """Batch tile: multiple of 8 (256/128-aligned when large), >=2 grid points
    for medium batches so both v7x TensorCores get work on the parallel axis."""
    tb = min(block_b, _round_up(batch, 8))
    if batch >= 16 and pl.cdiv(batch, tb) < 2:
        tb = _round_up(pl.cdiv(batch, 2), 8)
    if tb >= 256:
        tb = (tb // 256) * 256
    elif tb >= 128:
        tb = (tb // 128) * 128
    return max(tb, 8)


def _vmem_limit_bytes(tb, d, lp, feat_bytes, w_bytes, out_bytes):
    # Streamed per-step buffers are double-buffered; the resident weight/bias
    # are also counted twice (Pallas allocates two buffers even for a constant
    # index_map).  Cap at ~7/8 of the physical VMEM of this generation.
    streamed = tb * d * feat_bytes + tb * 4 + tb * lp * out_bytes
    resident = d * lp * w_bytes + lp * 4
    est = 2 * streamed + 2 * resident + tb * lp * 4 + (16 << 20)
    try:
        cap = int(pltpu.get_tpu_info().vmem_capacity_bytes)
    except Exception:
        cap = 64 << 20
    return int(min(max(est, 32 << 20), cap * 7 // 8))


# ---------------------------------------------------------------------------
# Forward
# ---------------------------------------------------------------------------

def softmax_classifier_forward(features, weight=None, bias=None, labels=None, *,
                               params=None, block_b=512, stream_dtype=None):
    """Forward pass mirroring the PyTorch SoftmaxClassifier.

    features: (B, D) sentence embeddings (f32 or bf16)
    weight:   (L, D) torch.nn.Linear layout (ignored if params given)
    bias:     (L,)                          (ignored if params given)
    labels:   (B,) int or None
    params:   optional cached output of prepare_classifier_params
    stream_dtype: optionally stream features/weight in this dtype (e.g. bf16)

    Returns: mean CE loss scalar if labels is not None, else (features, logits).
    """
    B, D = features.shape
    if params is None:
        params = prepare_classifier_params(weight, bias, param_dtype=stream_dtype)
    wt, b_pad, L = params
    Lp = wt.shape[1]

    feats = features if stream_dtype is None else features.astype(stream_dtype)

    TB = _choose_tile(B, block_b)
    num_tiles = pl.cdiv(B, TB)

    feat_bytes = jnp.dtype(feats.dtype).itemsize
    w_bytes = jnp.dtype(wt.dtype).itemsize
    out_dtype = feats.dtype
    out_bytes = jnp.dtype(out_dtype).itemsize if labels is None else 0

    vmem_limit = _vmem_limit_bytes(TB, D, Lp, feat_bytes, w_bytes, out_bytes)

    feat_spec = pl.BlockSpec((TB, D), lambda i: (i, 0))
    weight_spec = pl.BlockSpec((D, Lp), lambda i: (0, 0))   # VMEM-resident
    bias_spec = pl.BlockSpec((1, Lp), lambda i: (0, 0))     # VMEM-resident
    flops = 2 * B * D * Lp

    if labels is None:
        # Inference: lane-dense (Lp) logits in the streamed dtype; no CE work.
        logits = pl.pallas_call(
            _logits_kernel,
            out_shape=jax.ShapeDtypeStruct((B, Lp), out_dtype),
            grid=(num_tiles,),
            in_specs=[feat_spec, weight_spec, bias_spec],
            out_specs=pl.BlockSpec((TB, Lp), lambda i: (i, 0)),
            compiler_params=pltpu.CompilerParams(
                dimension_semantics=("parallel",),
                vmem_limit_bytes=vmem_limit),
            cost_estimate=pl.CostEstimate(
                flops=flops, transcendentals=0,
                bytes_accessed=B * D * feat_bytes + D * Lp * w_bytes
                + B * Lp * out_bytes),
        )(feats, wt, b_pad)
        return features, logits[:, :L]

    # Training: no logits writeback; accumulate the loss sum across the grid.
    labels2d = labels.reshape(B, 1).astype(jnp.int32)
    loss_sum = pl.pallas_call(
        _make_loss_kernel(B, TB),
        out_shape=jax.ShapeDtypeStruct((1, 1), jnp.float32),
        grid=(num_tiles,),
        in_specs=[feat_spec, weight_spec, bias_spec,
                  pl.BlockSpec((TB, 1), lambda i: (i, 0))],
        out_specs=pl.BlockSpec((1, 1), lambda i: (0, 0)),   # resident accumulator
        compiler_params=pltpu.CompilerParams(
            dimension_semantics=("arbitrary",),             # reduction axis
            vmem_limit_bytes=vmem_limit),
        cost_estimate=pl.CostEstimate(
            flops=flops, transcendentals=B * Lp,
            bytes_accessed=B * D * feat_bytes + D * Lp * w_bytes + B * 4 + 4),
    )(feats, wt, b_pad, labels2d)

    return loss_sum[0, 0] / B


# ---------------------------------------------------------------------------
# Reference + self-test
# ---------------------------------------------------------------------------

def _reference(features, weight, bias, labels=None):
    logits = jnp.dot(features, weight.T,
                     precision=jax.lax.Precision.HIGHEST) + bias
    if labels is None:
        return logits
    lse = jax.nn.logsumexp(logits, axis=-1)
    picked = jnp.take_along_axis(logits, labels[:, None], axis=-1)[:, 0]
    return jnp.mean(lse - picked)


if __name__ == "__main__":
    B = 8     # batch of sentence embeddings
    D = 32    # sentence_embedding_dimension
    L = 4     # num_labels

    key = jax.random.PRNGKey(0)
    k_feat, k_w, k_b, k_lab = jax.random.split(key, 4)

    features = jax.random.normal(k_feat, (B, D), dtype=jnp.float32)

    # Deterministic init matching torch.nn.Linear: U(-1/sqrt(D), 1/sqrt(D))
    bound = 1.0 / math.sqrt(D)
    weight = jax.random.uniform(k_w, (L, D), minval=-bound, maxval=bound,
                                dtype=jnp.float32)
    bias = jax.random.uniform(k_b, (L,), minval=-bound, maxval=bound,
                              dtype=jnp.float32)
    labels = jax.random.randint(k_lab, (B,), 0, L, dtype=jnp.int32)

    # Prepare/cache the lane-padded, transposed params once (hoisted per review).
    params = prepare_classifier_params(weight, bias)

    # Labels provided -> scalar loss (mirrors the PyTorch forward).
    loss = softmax_classifier_forward(features, labels=labels, params=params)
    loss = jax.block_until_ready(loss)

    # No labels -> (features, logits).
    feats_out, logits = softmax_classifier_forward(features, params=params)
    logits = jax.block_until_ready(logits)

    # Tolerances account for MXU default-precision bf16 passes on f32 operands.
    ref_loss = _reference(features, weight, bias, labels)
    ref_logits = _reference(features, weight, bias)
    assert jnp.allclose(loss, ref_loss, atol=3e-2, rtol=3e-2), (loss, ref_loss)
    assert jnp.allclose(logits, ref_logits, atol=3e-2, rtol=3e-2)
    assert feats_out.shape == features.shape

    # Batch not a multiple of the tile size: ragged last tile masked in-kernel.
    B2 = 10
    k_f2, k_l2 = jax.random.split(jax.random.PRNGKey(1))
    feats2 = jax.random.normal(k_f2, (B2, D), dtype=jnp.float32)
    labels2 = jax.random.randint(k_l2, (B2,), 0, L, dtype=jnp.int32)
    loss2 = jax.block_until_ready(
        softmax_classifier_forward(feats2, labels=labels2, params=params))
    ref_loss2 = _reference(feats2, weight, bias, labels2)
    assert jnp.allclose(loss2, ref_loss2, atol=3e-2, rtol=3e-2), (loss2, ref_loss2)

    # bf16 streaming path (bandwidth optimization); looser tolerance.
    loss_bf16 = jax.block_until_ready(
        softmax_classifier_forward(features, weight, bias, labels,
                                   stream_dtype=jnp.bfloat16))
    assert jnp.allclose(loss_bf16, ref_loss, atol=1e-1, rtol=1e-1), (loss_bf16,
                                                                     ref_loss)

    print("KERNEL_OK")
</pallas_src>

<mosaic_0001>
module attributes {stable_mosaic.version = 11 : i64} {
  func.func @kernel(%arg0: i32, %arg1: memref<8x32xf32, #tpu.memory_space<vmem>>, %arg2: memref<32x128xf32, #tpu.memory_space<vmem>>, %arg3: memref<1x128xf32, #tpu.memory_space<vmem>>, %arg4: memref<8x1xi32, #tpu.memory_space<vmem>>, %arg5: memref<1x1xf32, #tpu.memory_space<vmem>>) attributes {dimension_semantics = [#tpu.dimension_semantics<arbitrary>], iteration_bounds = array<i64: 1>, scalar_prefetch = 0 : i64, scratch_operands = 0 : i64, tpu.core_type = #tpu.core_type<tc>, window_params = [{transform_indices = @transform_0, window_bounds = array<i64: 8, 32>}, {pipeline_mode = #tpu.pipeline_mode<synchronous>, transform_indices = @transform_1, window_bounds = array<i64: 32, 128>}, {pipeline_mode = #tpu.pipeline_mode<synchronous>, transform_indices = @transform_2, window_bounds = array<i64: 1, 128>}, {transform_indices = @transform_3, window_bounds = array<i64: 8, 1>}, {pipeline_mode = #tpu.pipeline_mode<synchronous>, transform_indices = @transform_4, window_bounds = array<i64: 1, 1>}]} {
    %c0_i32 = arith.constant 0 : i32
    %0 = arith.cmpi eq, %arg0, %c0_i32 : i32
    %1 = arith.extui %0 : i1 to i32
    %c0_i32_0 = arith.constant 0 : i32
    %2 = arith.cmpi ne, %1, %c0_i32_0 : i32
    scf.if %2 {
      %cst_20 = arith.constant 0.000000e+00 : f32
      %46 = vector.broadcast %cst_20 : f32 to vector<1x1xf32>
      %c0_21 = arith.constant 0 : index
      %c0_22 = arith.constant 0 : index
      %47 = vector.load %arg5[%c0_21, %c0_22] : memref<1x1xf32, #tpu.memory_space<vmem>>, vector<1x1xf32>
      tpu.vector_store %arg5[%c0_21, %c0_22], %46 {strides = array<i32>} : memref<1x1xf32, #tpu.memory_space<vmem>>, vector<1x1xf32>,
    } else {
    }
    %c0 = arith.constant 0 : index
    %c0_1 = arith.constant 0 : index
    %3 = vector.load %arg1[%c0, %c0_1] : memref<8x32xf32, #tpu.memory_space<vmem>>, vector<8x32xf32>
    %c0_2 = arith.constant 0 : index
    %c0_3 = arith.constant 0 : index
    %4 = vector.load %arg2[%c0_2, %c0_3] : memref<32x128xf32, #tpu.memory_space<vmem>>, vector<32x128xf32>
    %cst = arith.constant dense<0.000000e+00> : vector<8x128xf32>
    %5 = tpu.matmul %3, %4, %cst {dimension_numbers = #tpu.dot_dimension_numbers<[1], [0], [0], [1], [0, 0, 1, 1], [], []>} : vector<8x32xf32>, vector<32x128xf32>, vector<8x128xf32> -> vector<8x128xf32>
    %c0_4 = arith.constant 0 : index
    %c0_5 = arith.constant 0 : index
    %6 = vector.load %arg3[%c0_4, %c0_5] : memref<1x128xf32, #tpu.memory_space<vmem>>, vector<1x128xf32>
    %7 = vector.broadcast %6 : vector<1x128xf32> to vector<8x128xf32>
    %8 = arith.addf %5, %7 : vector<8x128xf32>
    %cst_6 = arith.constant dense<0xFF800000> : vector<8xf32>
    %9 = vector.multi_reduction <maximumf>, %8, %cst_6 [1] : vector<8x128xf32> to vector<8xf32>
    %10 = vector.shape_cast %9 : vector<8xf32> to vector<8x1xf32>
    %11 = vector.broadcast %10 : vector<8x1xf32> to vector<8x128xf32>
    %12 = arith.subf %8, %11 : vector<8x128xf32>
    %13 = math.exp %12 : vector<8x128xf32>
    %cst_7 = arith.constant dense<0.000000e+00> : vector<8xf32>
    %14 = vector.multi_reduction <add>, %13, %cst_7 [1] : vector<8x128xf32> to vector<8xf32>
    %15 = vector.shape_cast %14 : vector<8xf32> to vector<8x1xf32>
    %16 = math.log %15 : vector<8x1xf32>
    %17 = arith.addf %10, %16 : vector<8x1xf32>
    %18 = tpu.iota {dimensions = array<i32: 1>} : vector<8x128xi32>
    %c0_8 = arith.constant 0 : index
    %c0_9 = arith.constant 0 : index
    %19 = vector.load %arg4[%c0_8, %c0_9] : memref<8x1xi32, #tpu.memory_space<vmem>>, vector<8x1xi32>
    %20 = vector.broadcast %19 : vector<8x1xi32> to vector<8x128xi32>
    %21 = arith.cmpi eq, %18, %20 : vector<8x128xi32>
    %cst_10 = arith.constant 0.000000e+00 : f32
    %22 = vector.broadcast %cst_10 : f32 to vector<8x128xf32>
    %23 = arith.select %21, %8, %22 : vector<8x128xi1>, vector<8x128xf32>
    %cst_11 = arith.constant dense<0.000000e+00> : vector<8xf32>
    %24 = vector.multi_reduction <add>, %23, %cst_11 [1] : vector<8x128xf32> to vector<8xf32>
    %25 = vector.shape_cast %24 : vector<8xf32> to vector<8x1xf32>
    %26 = arith.subf %17, %25 : vector<8x1xf32>
    %27 = tpu.iota {dimensions = array<i32: 0>} : vector<8x1xi32>
    %c8_i32 = arith.constant 8 : i32
    %28 = arith.muli %arg0, %c8_i32 : i32
    %29 = vector.broadcast %28 : i32 to vector<8x1xi32>
    %30 = arith.addi %27, %29 : vector<8x1xi32>
    %c8_i32_12 = arith.constant 8 : i32
    %31 = vector.broadcast %c8_i32_12 : i32 to vector<8x1xi32>
    %32 = arith.cmpi slt, %30, %31 : vector<8x1xi32>
    %c0_i32_13 = arith.constant 0 : i32
    %33 = vector.broadcast %c0_i32_13 : i32 to vector<8x1xi32>
    %34 = arith.cmpi sge, %19, %33 : vector<8x1xi32>
    %35 = arith.andi %32, %34 : vector<8x1xi1>
    %cst_14 = arith.constant 0.000000e+00 : f32
    %36 = vector.broadcast %cst_14 : f32 to vector<8x1xf32>
    %37 = arith.select %35, %26, %36 : vector<8x1xi1>, vector<8x1xf32>
    %38 = vector.shape_cast %37 : vector<8x1xf32> to vector<1x8x1xf32>
    %cst_15 = arith.constant dense<0.000000e+00> : vector<1xf32>
    %39 = vector.multi_reduction <add>, %38, %cst_15 [1, 2] : vector<1x8x1xf32> to vector<1xf32>
    %40 = vector.shape_cast %39 : vector<1xf32> to vector<1x1x1xf32>
    %41 = vector.extract %40[0, 0, 0] : f32 from vector<1x1x1xf32>
    %c0_16 = arith.constant 0 : index
    %c0_17 = arith.constant 0 : index
    %42 = vector.load %arg5[%c0_16, %c0_17] : memref<1x1xf32, #tpu.memory_space<vmem>>, vector<1x1xf32>
    %43 = vector.broadcast %41 : f32 to vector<1x1xf32>
    %44 = arith.addf %42, %43 : vector<1x1xf32>
    %c0_18 = arith.constant 0 : index
    %c0_19 = arith.constant 0 : index
    %45 = vector.load %arg5[%c0_18, %c0_19] : memref<1x1xf32, #tpu.memory_space<vmem>>, vector<1x1xf32>
    tpu.vector_store %arg5[%c0_18, %c0_19], %44 {strides = array<i32>} : memref<1x1xf32, #tpu.memory_space<vmem>>, vector<1x1xf32>,
    return
  }
  func.func @transform_0(%arg0: i32) -> (i32, i32) {
    %c0_i32 = arith.constant 0 : i32
    %c0_i32_0 = arith.constant 0 : i32
    return %arg0, %c0_i32 : i32, i32
  }
  func.func @transform_1(%arg0: i32) -> (i32, i32) {
    %c0_i32 = arith.constant 0 : i32
    %c0_i32_0 = arith.constant 0 : i32
    %c0_i32_1 = arith.constant 0 : i32
    return %c0_i32, %c0_i32_0 : i32, i32
  }
  func.func @transform_2(%arg0: i32) -> (i32, i32) {
    %c0_i32 = arith.constant 0 : i32
    %c0_i32_0 = arith.constant 0 : i32
    %c0_i32_1 = arith.constant 0 : i32
    return %c0_i32, %c0_i32_0 : i32, i32
  }
  func.func @transform_3(%arg0: i32) -> (i32, i32) {
    %c0_i32 = arith.constant 0 : i32
    %c0_i32_0 = arith.constant 0 : i32
    return %arg0, %c0_i32 : i32, i32
  }
  func.func @transform_4(%arg0: i32) -> (i32, i32) {
    %c0_i32 = arith.constant 0 : i32
    %c0_i32_0 = arith.constant 0 : i32
    %c0_i32_1 = arith.constant 0 : i32
    return %c0_i32, %c0_i32_0 : i32, i32
  }
}

</mosaic_0001>

<llo_original>
// kernel: tpu_custom_call.1
$region0: #{tpu_custom_call.1}
  #allocation0 [shape = 'u32[]', space=smem, size = 0x4, offset = 0x4, fixed_abs, tag = 'smem constant byte address 0x4 - core index']
  #allocation1 [shape = 'u32[144,128]{1,0:T(1,128)}', space=vmem, size = 0x12000, scoped, tag = 'internal scratch']
  %s0 = inlined_call_operand.vmem [shape: f32[8,32], index: 0, kind: input, shape index: {}]
  %s1 = inlined_call_operand.hbm [shape: f32[32,128], index: 1, kind: input, shape index: {}]
  %s2 = inlined_call_operand.vmem [shape: f32[1,128], index: 2, kind: input, shape index: {}]
  %s3 = inlined_call_operand.vmem [shape: s32[8,1], index: 3, kind: input, shape index: {}]
  %s4 = inlined_call_operand.hbm [shape: f32[1,1], index: 4, kind: output, shape index: {}]
  %s5 = sld [smem:[#allocation0]]
  $region34: #{tpu_custom_call.1} parent=0
    _
  %s7 = ssub.s32 1, %s5
  %s8 = scalar_select 0, %s7, %s5
  $region1: #{tpu_custom_call.1} parent=0
    #allocation2 [shape = 'u8[16384]{0}', space=vmem, size = 0x4000, scoped, tag = 'input window, operand 1, single buffered']
    #allocation3 [shape = 's32[1]{0}', space=sflag, size = 0x4, scoped, tag = 'scoped memory for tpu_custom_call.1']
    #allocation4 [shape = 's32[1]{0}', space=sflag, size = 0x4, scoped, tag = 'scoped memory for tpu_custom_call.1']
    #allocation5 [shape = 'u8[512]{0}', space=vmem, size = 0x400, scoped, tag = 'output window, operand 0, single buffered']
    %9 = vsyncpa [#allocation3], 0
    %10 = vsyncpa [#allocation4], 0
    // Predicated region
    $region2: #{tpu_custom_call.1} parent=1 // pred_check
      _
    $region3: #{tpu_custom_call.1} parent=1 // pred_check_branch
      %12 = sbr.rel (0) target = $region5
    $region4: #{tpu_custom_call.1} parent=1 // pred_region
      _
    $region5: #{tpu_custom_call.1} parent=1 // pred_fallthru
      _
    // Predicated region
    $region6: #{tpu_custom_call.1} parent=1 // pred_check
      _
    $region7: #{tpu_custom_call.1} parent=1 // pred_check_branch
      %14 = sbr.rel (0) target = $region9
    $region8: #{tpu_custom_call.1} parent=1 // pred_region
      %s16 = ssub.s32 512, 512
      %17 = vsyncadd [#allocation3], %s16
      %s18 = sshll.u32 [#allocation2], 4
      %s19 = int_to_ptr.vmem [resolvable:$true] %s18
      %24 = dma.hbm_to_vmem [thread:$0]  %s1, 512, %s19, [#allocation3], 128, 128, 8
    $region9: #{tpu_custom_call.1} parent=1 // pred_fallthru
      _
    // Predicated region
    $region10: #{tpu_custom_call.1} parent=1 // pred_check
      _
    $region11: #{tpu_custom_call.1} parent=1 // pred_check_branch
      %26 = sbr.rel (0) target = $region13
    $region12: #{tpu_custom_call.1} parent=1 // pred_region
      _
    $region13: #{tpu_custom_call.1} parent=1 // pred_fallthru
      _
    // Predicated region
    $region14: #{tpu_custom_call.1} parent=1 // pred_check
      _
    $region15: #{tpu_custom_call.1} parent=1 // pred_check_branch
      %28 = sbr.rel (0) target = $region17
    $region16: #{tpu_custom_call.1} parent=1 // pred_region
      _
    $region17: #{tpu_custom_call.1} parent=1 // pred_fallthru
      _
    // Predicated region
    $region18: #{tpu_custom_call.1} parent=1 // pred_check
      _
    $region19: #{tpu_custom_call.1} parent=1 // pred_check_branch
      %30 = sbr.rel (0) target = $region21
    $region20: #{tpu_custom_call.1} parent=1 // pred_region
      %31 = dma.done [#allocation3], 512
    $region21: #{tpu_custom_call.1} parent=1 // pred_fallthru
      _
    %p32 = scmp.eq.s32.totalorder 0, 0
    // Predicated region
    $region22: #{tpu_custom_call.1} parent=1 // pred_check
      %p33 = pneg %p32
    $region23: #{tpu_custom_call.1} parent=1 // pred_check_branch
      %35 = sbr.rel (%p33) target = $region25
    $region24: #{tpu_custom_call.1} parent=1 // pred_region
      %vm36 = vcmask 0
      %37 = vst.msk [vmem:[#allocation5] sm:$0x1] %vm36, 0.0
    $region25: #{tpu_custom_call.1} parent=1 // pred_fallthru
      _
    %v38 = vld [vmem:[%s0] sm:$0xff]
    %v39 = vld [vmem:[#allocation2] sm:$0xff]
    %v40 = vld [vmem:[#allocation2 + $0x8] sm:$0xff]
    %v41 = vld [vmem:[#allocation2 + $0x10] sm:$0xff]
    %v42 = vld [vmem:[#allocation2 + $0x18] sm:$0xff]
    %v43 = vld [vmem:[%s2] sm:$0x1]
    %v45 = vlaneseq
    %v46 = vshrl.u32 %v45, 7
    %v47 = vsub.s32 0, %v46
    %v48 = vrot.slane %v43, %v47
    %vm50 = vcmask 261120
    %v52 = vsel %vm50, %v38, 0
    %54 = vmatprep.subr.mxu0 0.0
    %55 = vmatpush1.msra.mxu0 %v39
    %56 = vmatprep.subr.mxu0 0.0
    %57 = vmatpush1.msra.mxu0 %v40
    %58 = vmatprep.subr.mxu0 0.0
    %59 = vmatpush1.msra.mxu0 %v41
    %60 = vmatprep.subr.mxu0 0.0
    %61 = vmatpush1.msra.mxu0 %v42
    %62 = vmatprep.subr.mxu0 0.0
    %63 = vmatpush1.msra.mxu0 0.0
    %64 = vmatprep.subr.mxu0 0.0
    %65 = vmatpush1.msra.mxu0 0.0
    %66 = vmatprep.subr.mxu0 0.0
    %67 = vmatpush1.msra.mxu0 0.0
    %68 = vmatprep.subr.mxu0 0.0
    %69 = vmatpush1.msra.mxu0 0.0
    %70 = vmatprep.subr.mxu0 0.0
    %71 = vmatpush1.msra.mxu0 0.0
    %72 = vmatprep.subr.mxu0 0.0
    %73 = vmatpush1.msra.mxu0 0.0
    %74 = vmatprep.subr.mxu0 0.0
    %75 = vmatpush1.msra.mxu0 0.0
    %76 = vmatprep.subr.mxu0 0.0
    %77 = vmatpush1.msra.mxu0 0.0
    %78 = vmatprep.subr.mxu0 0.0
    %79 = vmatpush1.msra.mxu0 0.0
    %80 = vmatprep.subr.mxu0 0.0
    %81 = vmatpush1.msra.mxu0 0.0
    %82 = vmatprep.subr.mxu0 0.0
    %83 = vmatpush1.msra.mxu0 0.0
    %84 = vmatprep.subr.mxu0 0.0
    %85 = vmatpush1.msra.mxu0 0.0
    %86 = vmatprep.subr.mxu0 0.0
    %87 = vmatpush1.msra.mxu0 0.0
    %88 = vmatprep.subr.mxu0 0.0
    %89 = vmatpush1.msra.mxu0 0.0
    %90 = vmatprep.subr.mxu0 0.0
    %91 = vmatpush1.msra.mxu0 0.0
    %92 = vmatprep.subr.mxu0 0.0
    %93 = vmatpush1.msra.mxu0 0.0
    %94 = vmatprep.subr.mxu0 0.0
    %95 = vmatpush1.msra.mxu0 0.0
    %96 = vmatprep.subr.mxu0 0.0
    %97 = vmatpush1.msra.mxu0 0.0
    %98 = vmatprep.subr.mxu0 0.0
    %99 = vmatpush1.msra.mxu0 0.0
    %100 = vmatprep.subr.mxu0 0.0
    %101 = vmatpush1.msra.mxu0 0.0
    %102 = vmatprep.subr.mxu0 0.0
    %103 = vmatpush1.msra.mxu0 0.0
    %104 = vmatprep.subr.mxu0 0.0
    %105 = vmatpush1.msra.mxu0 0.0
    %106 = vmatprep.subr.mxu0 0.0
    %107 = vmatpush1.msra.mxu0 0.0
    %108 = vmatprep.subr.mxu0 0.0
    %109 = vmatpush1.msra.mxu0 0.0
    %110 = vmatprep.subr.mxu0 0.0
    %111 = vmatpush1.msra.mxu0 0.0
    %112 = vmatprep.subr.mxu0 0.0
    %113 = vmatpush1.msra.mxu0 0.0
    %114 = vmatprep.subr.mxu0 0.0
    %115 = vmatpush1.msra.mxu0 0.0
    %116 = vmatprep.subr.mxu0 0.0
    %117 = vmatpush1.msra.mxu0 0.0
    %118 = vmatprep.mubr.f32.mxu0 0.0
    %119 = vmatmul.mubr.f32.gmra.mrb[0].mxu0 %v52
    %v120 = vpop.f32.mrb[0].mxu0
    %v121 = vadd.f32 %v48, %v120
    %v122 = vpop.f32.mrb[0].mxu0
    %123 = vdwg.mxu0
    %124 = vmax.xlane.f32.xlu0 %v121
    %v125 = vpop.xlane.xlu0 %124
    %v126 = vsub.f32 %v121, %v125
    %v127 = vmul.f32 %v126, 1.442695
    %v128 = vpow.pop %v127
    %129 = vadd.xlane.f32.xlu0 %v128
    %v130 = vpop.xlane.xlu0 %129
    %v131 = vlog2.pop %v130
    %v132 = vmul.f32 %v131, 0.6931472
    %v133 = vadd.f32 %v125, %v132
    %v134 = vlaneseq
    %v135 = vand.u32 %v134, 127
    %v136 = vld [vmem:[%s3] sm:$0xff]
    %137 = vset.pattern.permute.xlu0 0
    %138 = vperm.xlu0 %137, %v136
    %v139 = vpop.permute.xlu0 %138
    %vm140 = vcmp.eq.s32.totalorder %v135, %v139
    %v141 = vsel %vm140, %v121, 0.0
    %142 = vadd.xlane.f32.xlu0 %v141
    %v143 = vpop.xlane.xlu0 %142
    %v144 = vsub.f32 %v133, %v143
    %v145 = vlaneseq
    %v146 = vshrl.u32 %v145, 7
    %s147 = smul.u32 0, 8
    %v148 = vstv %s147
    %v149 = vadd.s32 %v146, %v148
    %vm150 = vcmp.lt.s32.totalorder %v149, 8
    %vm151 = vcmp.ge.s32.totalorder %v136, 0
    %vm152 = vmand %vm150, %vm151
    %v153 = vsel %vm152, %v144, 0.0
    %vm154 = vcmask 7168
    %v155 = vsel %vm154, %v153, 0.0
    %156 = vadd.xlane.f32.xlu0 %v155
    %v157 = vpop.xlane.xlu0 %156
    %v158 = vrot.slane %v157, 4
    %v159 = vadd.f32 %v157, %v158
    %v160 = vrot.slane %v159, 2
    %v161 = vadd.f32 %v159, %v160
    %v162 = vrot.slane %v161, 1
    %v163 = vadd.f32 %v161, %v162
    %s164 = vtos %v163
    %v165 = vld [vmem:[#allocation5] sm:$0x1]
    %v166 = vstv %s164
    %v167 = vadd.f32 %v165, %v166
    %vm168 = vcmask 0
    %169 = vst.msk [vmem:[#allocation5] sm:$0x1] %vm168, %v167
    // Predicated region
    $region26: #{tpu_custom_call.1} parent=1 // pred_check
      _
    $region27: #{tpu_custom_call.1} parent=1 // pred_check_branch
      %171 = sbr.rel (0) target = $region29
    $region28: #{tpu_custom_call.1} parent=1 // pred_region
      %s173 = ssub.s32 16, 16
      %174 = vsyncadd [#allocation4], %s173
      %s176 = sshll.u32 [#allocation5], 4
      %s177 = int_to_ptr.vmem [resolvable:$true] %s176
      %179 = dma.vmem_to_hbm [thread:$0]  %s177, 16, %s4, [#allocation4]
    $region29: #{tpu_custom_call.1} parent=1 // pred_fallthru
      _
    // Predicated region
    $region30: #{tpu_custom_call.1} parent=1 // pred_check
      _
    $region31: #{tpu_custom_call.1} parent=1 // pred_check_branch
      %181 = sbr.rel (0) target = $region33
    $region32: #{tpu_custom_call.1} parent=1 // pred_region
      %182 = dma.done [#allocation4], 16
    $region33: #{tpu_custom_call.1} parent=1 // pred_fallthru
      _
    %183 = vsyncpa [#allocation3], 1
    %184 = vsyncpa [#allocation4], 1

</llo_original>
